<compile_context>
chip_gen: v7x
topology: tpu7x:2x2x1
jax: 0.10.0
libtpu: 0.0.40
codegen_flags: <defaults>
</compile_context>

<pallas_src>
import functools

import jax
import jax.numpy as jnp
from jax.experimental import pallas as pl
from jax.experimental.pallas import tpu as pltpu


# ----------------------------------------------------------------------------
# Pallas kernels
# ----------------------------------------------------------------------------
def _gemm_bias_resident_kernel(p_ref, w_ref, b_ref, o_ref):
    """1-D M grid: whole sampled weight + bias resident in VMEM.

    Single MXU matmul (f32 accumulation), bias add fused into the epilogue,
    store-only writeback.  No scratch, no accumulator RMW.
    """
    o_ref[...] = (jnp.dot(p_ref[...], w_ref[...],
                          preferred_element_type=jnp.float32)
                  + b_ref[...]).astype(o_ref.dtype)


def _gemm_bias_ktiled_kernel(p_ref, w_ref, b_ref, o_ref, acc_ref):
    """Fallback for very large K*OC: K-tiled accumulation.

    Bias is folded into the accumulator init (k == 0) so the final writeback
    is a pure cast + store.
    """
    k = pl.program_id(1)

    @pl.when(k == 0)
    def _():
        acc_ref[...] = jnp.zeros_like(acc_ref) + b_ref[...]   # broadcast init

    acc_ref[...] += jnp.dot(p_ref[...], w_ref[...],
                            preferred_element_type=jnp.float32)

    @pl.when(k == pl.num_programs(1) - 1)
    def _():
        o_ref[...] = acc_ref[...].astype(o_ref.dtype)


# ----------------------------------------------------------------------------
# Host-side helpers (plain JAX glue)
# ----------------------------------------------------------------------------
def _round_up(x, m):
    return ((x + m - 1) // m) * m


def _im2col_nhwc(x_nchw, kh, kw, stride, padding, dilation, k_pad, dtype):
    """NCHW input -> patches (N*OH*OW, k_pad), K ordering (kh, kw, c).

    Emitted directly in the compute dtype and already K-padded via one extra
    zeros tap inside the concat: a single HBM materialization of the patches.
    """
    n, c, h, w = x_nchw.shape
    x = jnp.transpose(x_nchw, (0, 2, 3, 1)).astype(dtype)             # NHWC
    xp = jnp.pad(x, ((0, 0), (padding, padding), (padding, padding), (0, 0)))
    hp, wp = h + 2 * padding, w + 2 * padding
    oh = (hp - dilation * (kh - 1) - 1) // stride + 1
    ow = (wp - dilation * (kw - 1) - 1) // stride + 1
    slices = []
    for i in range(kh):
        for j in range(kw):
            slices.append(
                xp[:, i * dilation: i * dilation + stride * (oh - 1) + 1: stride,
                      j * dilation: j * dilation + stride * (ow - 1) + 1: stride, :])
    k_dim = kh * kw * c
    if k_pad > k_dim:                       # lane-pad K inside the same concat
        slices.append(jnp.zeros((n, oh, ow, k_pad - k_dim), dtype))
    patches = jnp.concatenate(slices, axis=-1)                        # (N,OH,OW,k_pad)
    return patches.reshape(n * oh * ow, k_pad), oh, ow


@functools.partial(jax.jit, static_argnames=("kernel_size", "stride",
                                             "padding", "dilation",
                                             "prior_mu", "prior_sigma",
                                             "compute_dtype", "out_dtype"))
def bayes_conv2d_forward(x, w_mu, w_rho, w_eps, b_mu, b_rho, b_eps,
                         *, kernel_size, stride, padding, dilation,
                         prior_mu, prior_sigma,
                         compute_dtype=jnp.bfloat16, out_dtype=None):
    """Training-mode forward of BayesConv2d. Returns (outputs_nchw, kl)."""
    n, c, _, _ = x.shape
    oc = w_mu.shape[0]
    kh, kw = kernel_size
    out_dtype = x.dtype if out_dtype is None else out_dtype

    # --- sample weight & bias once (tiny O(#params) elementwise XLA op) ------
    weight = w_mu + w_eps * jax.nn.softplus(w_rho)                    # (OC,C,KH,KW)
    b_sigma = jax.nn.softplus(b_rho)
    bias = (b_mu + b_eps * b_sigma).reshape(1, oc)                    # (1, OC)

    cd_bytes = jnp.dtype(compute_dtype).itemsize
    o_bytes = jnp.dtype(out_dtype).itemsize

    k_dim = kh * kw * c
    oc_pad = _round_up(oc, 128)                                       # lane-dense N

    # Keep the whole sampled weight resident in VMEM unless it is huge
    # (> ~6 MiB per buffer, i.e. far beyond typical conv shapes).
    resident = 2 * _round_up(k_dim, 128) * oc_pad * cd_bytes <= (12 << 20)
    tk = None if resident else 512
    k_pad = _round_up(k_dim, 128) if resident else _round_up(k_dim, tk)
    k_blk = k_pad if resident else tk

    # --- im2col: single compute-dtype, K-padded materialization --------------
    patches, oh, ow = _im2col_nhwc(x, kh, kw, stride, padding, dilation,
                                   k_pad, compute_dtype)
    m_dim = n * oh * ow

    # weight in the same K ordering as the patches: (KH,KW,C,OC) -> (K, OC)
    w2d = weight.transpose(2, 3, 1, 0).reshape(k_dim, oc)
    w_p = jnp.pad(w2d, ((0, k_pad - k_dim), (0, oc_pad - oc))).astype(compute_dtype)
    b_p = jnp.pad(bias, ((0, 0), (0, oc_pad - oc))).astype(jnp.float32)

    # --- tile selection: large M tiles within a VMEM budget, full-N weight ---
    tn = oc_pad
    tm = 128
    for cand in (1024, 768, 512, 384, 256, 128):   # biggest tile that fits
        need = 2 * (cand * k_blk * cd_bytes
                    + k_blk * oc_pad * cd_bytes
                    + cand * oc_pad * o_bytes)
        if need <= (20 << 20):                     # v7x-safe working set
            tm = cand
            break
    tm = min(tm, _round_up(max(m_dim, 1), 128))
    # Keep >= 2 M steps so both TensorCores get work on v7x megacore.
    while m_dim > 128 and _round_up(m_dim, tm) // tm < 2 and tm > 128:
        tm //= 2
    m_pad = _round_up(m_dim, tm)                   # pad M up, don't shrink tile
    if m_pad > m_dim:
        patches = jnp.pad(patches, ((0, m_pad - m_dim), (0, 0)))

    # --- advisory cost estimate + explicit VMEM budget ------------------------
    cost = pl.CostEstimate(
        flops=int(2 * m_pad * k_pad * oc_pad),
        transcendentals=0,
        bytes_accessed=int(m_pad * k_pad * cd_bytes + k_pad * oc_pad * cd_bytes
                           + oc_pad * 4 + m_pad * oc_pad * o_bytes))
    need_vmem = (2 * (tm * k_blk * cd_bytes + k_blk * oc_pad * cd_bytes
                      + tm * oc_pad * o_bytes)
                 + (0 if resident else tm * oc_pad * 4))
    vmem_limit = int(min(max(2 * need_vmem, 32 << 20), 48 << 20))

    if resident:
        out_flat = pl.pallas_call(
            _gemm_bias_resident_kernel,
            out_shape=jax.ShapeDtypeStruct((m_pad, oc_pad), out_dtype),
            grid_spec=pltpu.PrefetchScalarGridSpec(
                num_scalar_prefetch=0,
                grid=(m_pad // tm,),
                in_specs=[
                    pl.BlockSpec((tm, k_pad), lambda i: (i, 0)),   # patches (streamed once)
                    pl.BlockSpec((k_pad, tn), lambda i: (0, 0)),   # weight (VMEM-resident)
                    pl.BlockSpec((1, tn), lambda i: (0, 0)),       # bias   (VMEM-resident)
                ],
                out_specs=pl.BlockSpec((tm, tn), lambda i: (i, 0)),
            ),
            compiler_params=pltpu.CompilerParams(
                dimension_semantics=("parallel",),
                vmem_limit_bytes=vmem_limit),
            cost_estimate=cost,
        )(patches, w_p, b_p)
    else:
        out_flat = pl.pallas_call(
            _gemm_bias_ktiled_kernel,
            out_shape=jax.ShapeDtypeStruct((m_pad, oc_pad), out_dtype),
            grid_spec=pltpu.PrefetchScalarGridSpec(
                num_scalar_prefetch=0,
                grid=(m_pad // tm, k_pad // tk),                   # reduction last
                in_specs=[
                    pl.BlockSpec((tm, tk), lambda i, k: (i, k)),
                    pl.BlockSpec((tk, tn), lambda i, k: (k, 0)),
                    pl.BlockSpec((1, tn), lambda i, k: (0, 0)),
                ],
                out_specs=pl.BlockSpec((tm, tn), lambda i, k: (i, 0)),
                scratch_shapes=[pltpu.VMEM((tm, tn), jnp.float32)],
            ),
            compiler_params=pltpu.CompilerParams(
                dimension_semantics=("parallel", "arbitrary"),
                vmem_limit_bytes=vmem_limit),
            cost_estimate=cost,
        )(patches, w_p, b_p)

    # Slice off padding; the flat output is already NHWC-ordered.  The final
    # NHWC->NCHW transpose is kept to preserve the PyTorch module's output
    # layout (a fused consumer could take NHWC directly and skip it).
    outputs = out_flat[:m_dim, :oc].reshape(n, oh, ow, oc).transpose(0, 3, 1, 2)

    # --- KL divergence -------------------------------------------------------
    # Mirrors the reference module EXACTLY: it calls compute_kld twice on the
    # *bias* posterior (and never on the weight posterior), so the bias KL is
    # counted twice by design of the spec.
    kld_bias = 0.5 * jnp.sum(
        2.0 * jnp.log(prior_sigma / b_sigma) - 1.0
        + (b_sigma / prior_sigma) ** 2
        + ((prior_mu - b_mu) / prior_sigma) ** 2)
    kl_divergence = kld_bias + kld_bias

    return outputs, kl_divergence


# ----------------------------------------------------------------------------
# Pure-JAX reference for correctness checking
# ----------------------------------------------------------------------------
def _reference_forward(x, w_mu, w_rho, w_eps, b_mu, b_rho, b_eps,
                       stride, padding, dilation):
    weight = w_mu + w_eps * jax.nn.softplus(w_rho)
    bias = b_mu + b_eps * jax.nn.softplus(b_rho)
    out = jax.lax.conv_general_dilated(
        x, weight,
        window_strides=(stride, stride),
        padding=[(padding, padding), (padding, padding)],
        rhs_dilation=(dilation, dilation),
        dimension_numbers=("NCHW", "OIHW", "NCHW"),
        precision=jax.lax.Precision.HIGHEST)
    return out + bias[None, :, None, None]


if __name__ == "__main__":
    in_channels, out_channels = 4, 8
    kernel_size = (3, 3)
    stride, padding, dilation = 1, 1, 1
    prior_mu, prior_sigma = 0.0, 0.1
    posterior_mu_initial = (0.0, 0.1)
    posterior_rho_initial = (-3.0, 0.1)

    N, H, W = 2, 16, 16

    key = jax.random.PRNGKey(0)
    kx, kwm, kwr, kbm, kbr, kwe, kbe = jax.random.split(key, 7)

    x = jax.random.normal(kx, (N, in_channels, H, W), jnp.float32)

    w_shape = (out_channels, in_channels, *kernel_size)
    w_mu = posterior_mu_initial[0] + posterior_mu_initial[1] * \
        jax.random.normal(kwm, w_shape, jnp.float32)
    w_rho = posterior_rho_initial[0] + posterior_rho_initial[1] * \
        jax.random.normal(kwr, w_shape, jnp.float32)
    b_mu = posterior_mu_initial[0] + posterior_mu_initial[1] * \
        jax.random.normal(kbm, (out_channels,), jnp.float32)
    b_rho = posterior_rho_initial[0] + posterior_rho_initial[1] * \
        jax.random.normal(kbr, (out_channels,), jnp.float32)

    # Training-mode reparameterization noise, passed in explicitly
    # (torch's in-forward RNG has no in-kernel equivalent here).
    w_eps = jax.random.normal(kwe, w_shape, jnp.float32)
    b_eps = jax.random.normal(kbe, (out_channels,), jnp.float32)

    ref = _reference_forward(x, w_mu, w_rho, w_eps, b_mu, b_rho, b_eps,
                             stride, padding, dilation)

    # Fast path: bf16 MXU operands, f32 accumulation.
    out_bf16, kld = bayes_conv2d_forward(
        x, w_mu, w_rho, w_eps, b_mu, b_rho, b_eps,
        kernel_size=kernel_size, stride=stride, padding=padding,
        dilation=dilation, prior_mu=prior_mu, prior_sigma=prior_sigma,
        compute_dtype=jnp.bfloat16)
    out_bf16 = jax.block_until_ready(out_bf16)
    kld = jax.block_until_ready(kld)

    assert out_bf16.shape == (N, out_channels, H, W), out_bf16.shape
    assert jnp.allclose(out_bf16, ref, atol=5e-2, rtol=5e-2), \
        float(jnp.max(jnp.abs(out_bf16 - ref)))
    assert jnp.isfinite(kld)

    # Strict-precision configuration (f32 operands) for a tight check.
    out_f32, kld_f32 = bayes_conv2d_forward(
        x, w_mu, w_rho, w_eps, b_mu, b_rho, b_eps,
        kernel_size=kernel_size, stride=stride, padding=padding,
        dilation=dilation, prior_mu=prior_mu, prior_sigma=prior_sigma,
        compute_dtype=jnp.float32)
    out_f32 = jax.block_until_ready(out_f32)
    assert jnp.allclose(out_f32, ref, atol=1e-3, rtol=1e-3), \
        float(jnp.max(jnp.abs(out_f32 - ref)))
    assert jnp.isfinite(kld_f32)

    print("KERNEL_OK")
</pallas_src>

<mosaic_0001>
module attributes {stable_mosaic.version = 11 : i64} {
  func.func @_gemm_bias_resident_kernel(%arg0: i32, %arg1: memref<256x128xbf16, #tpu.memory_space<vmem>>, %arg2: memref<128x128xbf16, #tpu.memory_space<vmem>>, %arg3: memref<1x128xf32, #tpu.memory_space<vmem>>, %arg4: memref<256x128xf32, #tpu.memory_space<vmem>>) attributes {dimension_semantics = [#tpu.dimension_semantics<parallel>], iteration_bounds = array<i64: 2>, scalar_prefetch = 0 : i64, scratch_operands = 0 : i64, tpu.core_type = #tpu.core_type<tc>, window_params = [{transform_indices = @transform_0, window_bounds = array<i64: 256, 128>}, {pipeline_mode = #tpu.pipeline_mode<synchronous>, transform_indices = @transform_1, window_bounds = array<i64: 128, 128>}, {pipeline_mode = #tpu.pipeline_mode<synchronous>, transform_indices = @transform_2, window_bounds = array<i64: 1, 128>}, {transform_indices = @transform_3, window_bounds = array<i64: 256, 128>}]} {
    %c0 = arith.constant 0 : index
    %c0_0 = arith.constant 0 : index
    %0 = vector.load %arg1[%c0, %c0_0] : memref<256x128xbf16, #tpu.memory_space<vmem>>, vector<256x128xbf16>
    %c0_1 = arith.constant 0 : index
    %c0_2 = arith.constant 0 : index
    %1 = vector.load %arg2[%c0_1, %c0_2] : memref<128x128xbf16, #tpu.memory_space<vmem>>, vector<128x128xbf16>
    %cst = arith.constant dense<0.000000e+00> : vector<256x128xf32>
    %2 = tpu.matmul %0, %1, %cst {dimension_numbers = #tpu.dot_dimension_numbers<[1], [0], [0], [1], [0, 0, 1, 1], [], []>} : vector<256x128xbf16>, vector<128x128xbf16>, vector<256x128xf32> -> vector<256x128xf32>
    %c0_3 = arith.constant 0 : index
    %c0_4 = arith.constant 0 : index
    %3 = vector.load %arg3[%c0_3, %c0_4] : memref<1x128xf32, #tpu.memory_space<vmem>>, vector<1x128xf32>
    %4 = vector.broadcast %3 : vector<1x128xf32> to vector<256x128xf32>
    %5 = arith.addf %2, %4 : vector<256x128xf32>
    %c0_5 = arith.constant 0 : index
    %c0_6 = arith.constant 0 : index
    %6 = vector.load %arg4[%c0_5, %c0_6] : memref<256x128xf32, #tpu.memory_space<vmem>>, vector<256x128xf32>
    tpu.vector_store %arg4[%c0_5, %c0_6], %5 {strides = array<i32>} : memref<256x128xf32, #tpu.memory_space<vmem>>, vector<256x128xf32>,
    return
  }
  func.func @transform_0(%arg0: i32) -> (i32, i32) {
    %c0_i32 = arith.constant 0 : i32
    %c0_i32_0 = arith.constant 0 : i32
    return %arg0, %c0_i32 : i32, i32
  }
  func.func @transform_1(%arg0: i32) -> (i32, i32) {
    %c0_i32 = arith.constant 0 : i32
    %c0_i32_0 = arith.constant 0 : i32
    %c0_i32_1 = arith.constant 0 : i32
    return %c0_i32, %c0_i32_0 : i32, i32
  }
  func.func @transform_2(%arg0: i32) -> (i32, i32) {
    %c0_i32 = arith.constant 0 : i32
    %c0_i32_0 = arith.constant 0 : i32
    %c0_i32_1 = arith.constant 0 : i32
    return %c0_i32, %c0_i32_0 : i32, i32
  }
  func.func @transform_3(%arg0: i32) -> (i32, i32) {
    %c0_i32 = arith.constant 0 : i32
    %c0_i32_0 = arith.constant 0 : i32
    return %arg0, %c0_i32 : i32, i32
  }
}

</mosaic_0001>

<llo_original>
// kernel: bayes_conv2d_forward.1
$region0: #{bayes_conv2d_forward.1}
  #allocation0 [shape = 'u32[]', space=smem, size = 0x4, offset = 0x4, fixed_abs, tag = 'smem constant byte address 0x4 - core index']
  #allocation1 [shape = 'u32[144,128]{1,0:T(1,128)}', space=vmem, size = 0x12000, scoped, tag = 'internal scratch']
  %s0 = inlined_call_operand.vmem [shape: bf16[512,128], index: 0, kind: input, shape index: {}]
  %s1 = inlined_call_operand.vmem [shape: bf16[128,128], index: 1, kind: input, shape index: {}]
  %s2 = inlined_call_operand.vmem [shape: f32[1,128], index: 2, kind: input, shape index: {}]
  %s3 = inlined_call_operand.vmem [shape: f32[512,128], index: 3, kind: output, shape index: {}]
  %s4 = sld [smem:[#allocation0]]
  $region45: #{bayes_conv2d_forward.1} parent=0
    _
  %s6 = ssub.s32 1, %s4
  %s7 = scalar_select 0, %s6, %s4
  loop: start=0, step=1, limit=4
  $region2: #{bayes_conv2d_forward.1} parent=0 // loop_pre_header
    _
  $region3: #{bayes_conv2d_forward.1} parent=0 // loop_header
    %s9 = sphi 0, %s13
    %p10 = scmp.ge.s32.totalorder %s9, 4
    %s19 = sphi 0, %s21
    %s22 = sphi 0, %s19
    %s23 = sphi 0, %s22
    %s39 = sphi 0, %s23
    %s43 = sphi 0, %s43
    %s45 = sphi 0, %s43
    %s46 = sphi 0, %s45
    %s60 = sphi 0, %s46
    %s64 = sphi 0, %s64
    %s66 = sphi 0, %s64
    %s67 = sphi 0, %s66
    %s81 = sphi 0, %s67
    %s87 = sphi 0, %s89
    %s90 = sphi 0, %s87
    %s91 = sphi 0, %s90
    %s107 = sphi 0, %s91
  $region4: #{bayes_conv2d_forward.1} parent=0 // loop_header_branch
    %12 = sbr.rel (%p10) target = $region8
  $region5: #{bayes_conv2d_forward.1} parent=0 // loop_body
    %s14 = ssub.s32 %s9, 1
    %s15 = ssub.s32 %s9, 2
    %s16 = sadd.s32 %s9, 1
    %s17 = ssub.s32 %s9, %s16
    %p18 = scmp.eq.s32.totalorder %s17, 0
    %s20 = sadd.s32 %s19, 1
    %s21 = scalar_select %p18, %s19, %s20
    %p24 = pneg %p18
    %p25 = scmp.eq.s32.totalorder %s9, 1
    %p26 = por %p24, %p25
    %p27 = scmp.ne.s32.totalorder %s19, %s22
    %p28 = scmp.eq.s32.totalorder %s9, 0
    %p29 = por %p27, %p28
    %p30 = scmp.ne.s32.totalorder %s19, %s22
    %p31 = scmp.eq.s32.totalorder %s14, 1
    %p32 = por %p30, %p31
    %p33 = scmp.ne.s32.totalorder %s22, %s23
    %p34 = scmp.eq.s32.totalorder %s14, 0
    %p35 = por %p33, %p34
    %p36 = scmp.ne.s32.totalorder %s22, %s23
    %p37 = scmp.eq.s32.totalorder %s15, 1
    %p38 = por %p36, %p37
    %p40 = scmp.ne.s32.totalorder %s23, %s39
    %p41 = scmp.eq.s32.totalorder %s15, 0
    %p42 = por %p40, %p41
    %s44 = sadd.s32 %s43, 1
    %p47 = scmp.eq.s32.totalorder %s9, 1
    %p48 = scmp.ne.s32.totalorder %s43, %s45
    %p49 = scmp.eq.s32.totalorder %s9, 0
    %p50 = por %p48, %p49
    %p51 = scmp.ne.s32.totalorder %s43, %s45
    %p52 = scmp.eq.s32.totalorder %s14, 1
    %p53 = por %p51, %p52
    %p54 = scmp.ne.s32.totalorder %s45, %s46
    %p55 = scmp.eq.s32.totalorder %s14, 0
    %p56 = por %p54, %p55
    %p57 = scmp.ne.s32.totalorder %s45, %s46
    %p58 = scmp.eq.s32.totalorder %s15, 1
    %p59 = por %p57, %p58
    %p61 = scmp.ne.s32.totalorder %s46, %s60
    %p62 = scmp.eq.s32.totalorder %s15, 0
    %p63 = por %p61, %p62
    %s65 = sadd.s32 %s64, 1
    %p68 = scmp.eq.s32.totalorder %s9, 1
    %p69 = scmp.ne.s32.totalorder %s64, %s66
    %p70 = scmp.eq.s32.totalorder %s9, 0
    %p71 = por %p69, %p70
    %p72 = scmp.ne.s32.totalorder %s64, %s66
    %p73 = scmp.eq.s32.totalorder %s14, 1
    %p74 = por %p72, %p73
    %p75 = scmp.ne.s32.totalorder %s66, %s67
    %p76 = scmp.eq.s32.totalorder %s14, 0
    %p77 = por %p75, %p76
    %p78 = scmp.ne.s32.totalorder %s66, %s67
    %p79 = scmp.eq.s32.totalorder %s15, 1
    %p80 = por %p78, %p79
    %p82 = scmp.ne.s32.totalorder %s67, %s81
    %p83 = scmp.eq.s32.totalorder %s15, 0
    %p84 = por %p82, %p83
    %s85 = ssub.s32 %s9, %s16
    %p86 = scmp.eq.s32.totalorder %s85, 0
    %s88 = sadd.s32 %s87, 1
    %s89 = scalar_select %p86, %s87, %s88
    %p92 = pneg %p86
    %p93 = scmp.eq.s32.totalorder %s9, 1
    %p94 = por %p92, %p93
    %p95 = scmp.ne.s32.totalorder %s87, %s90
    %p96 = scmp.eq.s32.totalorder %s9, 0
    %p97 = por %p95, %p96
    %p98 = scmp.ne.s32.totalorder %s87, %s90
    %p99 = scmp.eq.s32.totalorder %s14, 1
    %p100 = por %p98, %p99
    %p101 = scmp.ne.s32.totalorder %s90, %s91
    %p102 = scmp.eq.s32.totalorder %s14, 0
    %p103 = por %p101, %p102
    %p104 = scmp.ne.s32.totalorder %s90, %s91
    %p105 = scmp.eq.s32.totalorder %s15, 1
    %p106 = por %p104, %p105
    %p108 = scmp.ne.s32.totalorder %s91, %s107
    %p109 = scmp.eq.s32.totalorder %s15, 0
    %p110 = por %p108, %p109
    %p111 = scmp.le.s32.totalorder 1, %s9
    %p112 = scmp.lt.s32.totalorder %s9, 3
    %p113 = pnand %p111, %p112
    %p114 = pneg %p113
    // Predicated region
    $region9: #{bayes_conv2d_forward.1} parent=5 // pred_check
      _
    $region10: #{bayes_conv2d_forward.1} parent=5 // pred_check_branch
      %116 = sbr.rel (%p113) target = $region12
    $region11: #{bayes_conv2d_forward.1} parent=5 // pred_region
      %s117 = ssub.s32 %s9, 1
      // Predicated region
      $region13: #{bayes_conv2d_forward.1} parent=11 // pred_check
        %p118 = pneg %p56
      $region14: #{bayes_conv2d_forward.1} parent=11 // pred_check_branch
        %120 = sbr.rel (%p118) target = $region16
      $region15: #{bayes_conv2d_forward.1} parent=11 // pred_region
        _
      $region16: #{bayes_conv2d_forward.1} parent=11 // pred_fallthru
        _
      // Predicated region
      $region17: #{bayes_conv2d_forward.1} parent=11 // pred_check
        %p121 = pneg %p77
      $region18: #{bayes_conv2d_forward.1} parent=11 // pred_check_branch
        %123 = sbr.rel (%p121) target = $region20
      $region19: #{bayes_conv2d_forward.1} parent=11 // pred_region
        _
      $region20: #{bayes_conv2d_forward.1} parent=11 // pred_fallthru
        _
    $region12: #{bayes_conv2d_forward.1} parent=5 // pred_fallthru
      _
    %p124 = scmp.lt.s32.totalorder %s9, 2
    // Predicated region
    $region21: #{bayes_conv2d_forward.1} parent=5 // pred_check
      %p125 = pneg %p124
    $region22: #{bayes_conv2d_forward.1} parent=5 // pred_check_branch
      %127 = sbr.rel (%p125) target = $region24
    $region23: #{bayes_conv2d_forward.1} parent=5 // pred_region
      // Predicated region
      $region25: #{bayes_conv2d_forward.1} parent=23 // pred_check
        %p128 = pneg %p29
      $region26: #{bayes_conv2d_forward.1} parent=23 // pred_check_branch
        %130 = sbr.rel (%p128) target = $region28
      $region27: #{bayes_conv2d_forward.1} parent=23 // pred_region
        %s131 = smul.u32 32, %s9
        %p132 = scmp.lt.s32.totalorder %s131, 63
        %s133 = scalar_select %p132, %s131, 63
        %s134 = smul.addr %s133, 4
        %s135 = scalar_lea.vmem %s0, %s134
        %s136 = smul.u32 32, %s9
      $region28: #{bayes_conv2d_forward.1} parent=23 // pred_fallthru
        _
    $region24: #{bayes_conv2d_forward.1} parent=5 // pred_fallthru
      _
    %p137 = scmp.le.s32.totalorder 1, %s9
    %p138 = scmp.lt.s32.totalorder %s9, 3
    %p139 = pnand %p137, %p138
    %p140 = pneg %p139
    // Predicated region
    $region29: #{bayes_conv2d_forward.1} parent=5 // pred_check
      _
    $region30: #{bayes_conv2d_forward.1} parent=5 // pred_check_branch
      %142 = sbr.rel (%p139) target = $region32
    $region31: #{bayes_conv2d_forward.1} parent=5 // pred_region
      %s143 = ssub.s32 %s9, 1
      %s144 = smul.u32 32, %s14
      %p145 = scmp.lt.s32.totalorder %s144, 63
      %s146 = scalar_select %p145, %s144, 63
      %s147 = smul.addr %s146, 4
      %s148 = scalar_lea.vmem %s0, %s147
      %p149 = pneg %p35
      %p150 = pneg %p32
      %p151 = pneg %p56
      %p152 = pneg %p53
      %p153 = pneg %p77
      %p154 = pneg %p74
      %p155 = pneg %p103
      %p156 = pneg %p100
      %s157 = smul.u32 32, %s14
      %p158 = scmp.lt.s32.totalorder %s157, 63
      %s159 = scalar_select %p158, %s157, 63
      %s160 = smul.addr %s159, 8
      %s161 = scalar_lea.vmem %s3, %s160
      %s162 = smul.u32 32, %s14
      %p163 = scmp.lt.s32.totalorder %s162, 63
      %s164 = scalar_select %p163, %s162, 63
      %s165 = smul.addr %s164, 4
      %s166 = scalar_lea.vmem %s0, %s165
      %s167 = smul.u32 32, %s14
      %s168 = smul.u32 32, %s14
      %p169 = scmp.lt.s32.totalorder %s168, 63
      %s170 = scalar_select %p169, %s168, 63
      %s171 = smul.addr %s170, 8
      %s172 = scalar_lea.vmem %s3, %s171
      %s173 = smul.u32 32, %s14
      %v175 = vld [vmem:[%s166] sm:$0xf]
      %v176 = vld [vmem:[%s166 + $0x4] sm:$0xf]
      %v177 = vld [vmem:[%s166 + $0x8] sm:$0xf]
      %v178 = vld [vmem:[%s166 + $0xc] sm:$0xf]
      %v179 = vld [vmem:[%s166 + $0x10] sm:$0xf]
      %v180 = vld [vmem:[%s166 + $0x14] sm:$0xf]
      %v181 = vld [vmem:[%s166 + $0x18] sm:$0xf]
      %v182 = vld [vmem:[%s166 + $0x1c] sm:$0xf]
      %v183 = vld [vmem:[%s166 + $0x20] sm:$0xf]
      %v184 = vld [vmem:[%s166 + $0x24] sm:$0xf]
      %v185 = vld [vmem:[%s166 + $0x28] sm:$0xf]
      %v186 = vld [vmem:[%s166 + $0x2c] sm:$0xf]
      %v187 = vld [vmem:[%s166 + $0x30] sm:$0xf]
      %v188 = vld [vmem:[%s166 + $0x34] sm:$0xf]
      %v189 = vld [vmem:[%s166 + $0x38] sm:$0xf]
      %v190 = vld [vmem:[%s166 + $0x3c] sm:$0xf]
      %v191 = vld [vmem:[%s166 + $0x40] sm:$0xf]
      %v192 = vld [vmem:[%s166 + $0x44] sm:$0xf]
      %v193 = vld [vmem:[%s166 + $0x48] sm:$0xf]
      %v194 = vld [vmem:[%s166 + $0x4c] sm:$0xf]
      %v195 = vld [vmem:[%s166 + $0x50] sm:$0xf]
      %v196 = vld [vmem:[%s166 + $0x54] sm:$0xf]
      %v197 = vld [vmem:[%s166 + $0x58] sm:$0xf]
      %v198 = vld [vmem:[%s166 + $0x5c] sm:$0xf]
      %v199 = vld [vmem:[%s166 + $0x60] sm:$0xf]
      %v200 = vld [vmem:[%s166 + $0x64] sm:$0xf]
      %v201 = vld [vmem:[%s166 + $0x68] sm:$0xf]
      %v202 = vld [vmem:[%s166 + $0x6c] sm:$0xf]
      %v203 = vld [vmem:[%s166 + $0x70] sm:$0xf]
      %v204 = vld [vmem:[%s166 + $0x74] sm:$0xf]
      %v205 = vld [vmem:[%s166 + $0x78] sm:$0xf]
      %v206 = vld [vmem:[%s166 + $0x7c] sm:$0xf]
      %v207 = vld [vmem:[%s1] sm:$0xf]
      %v208 = vld [vmem:[%s1 + $0x4] sm:$0xf]
      %v209 = vld [vmem:[%s1 + $0x8] sm:$0xf]
      %v210 = vld [vmem:[%s1 + $0xc] sm:$0xf]
      %v211 = vld [vmem:[%s1 + $0x10] sm:$0xf]
      %v212 = vld [vmem:[%s1 + $0x14] sm:$0xf]
      %v213 = vld [vmem:[%s1 + $0x18] sm:$0xf]
      %v214 = vld [vmem:[%s1 + $0x1c] sm:$0xf]
      %v215 = vld [vmem:[%s1 + $0x20] sm:$0xf]
      %v216 = vld [vmem:[%s1 + $0x24] sm:$0xf]
      %v217 = vld [vmem:[%s1 + $0x28] sm:$0xf]
      %v218 = vld [vmem:[%s1 + $0x2c] sm:$0xf]
      %v219 = vld [vmem:[%s1 + $0x30] sm:$0xf]
      %v220 = vld [vmem:[%s1 + $0x34] sm:$0xf]
      %v221 = vld [vmem:[%s1 + $0x38] sm:$0xf]
      %v222 = vld [vmem:[%s1 + $0x3c] sm:$0xf]
      %v223 = vld [vmem:[%s2] sm:$0x1]
      %v225 = vlaneseq
      %v226 = vshrl.u32 %v225, 7
      %v227 = vsub.s32 0, %v226
      %v228 = vrot.slane %v223, %v227
      %v262 = vunpack.c.l.b16 %v175
      %v263 = vunpack.c.l.b16 %v176
      %v264 = vunpack.c.l.b16 %v177
      %v265 = vunpack.c.l.b16 %v178
      %v266 = vunpack.c.l.b16 %v179
      %v267 = vunpack.c.l.b16 %v180
      %v268 = vunpack.c.l.b16 %v181
      %v269 = vunpack.c.l.b16 %v182
      %v270 = vunpack.c.l.b16 %v183
      %v271 = vunpack.c.l.b16 %v184
      %v272 = vunpack.c.l.b16 %v185
      %v273 = vunpack.c.l.b16 %v186
      %v274 = vunpack.c.l.b16 %v187
      %v275 = vunpack.c.l.b16 %v188
      %v276 = vunpack.c.l.b16 %v189
      %v277 = vunpack.c.l.b16 %v190
      %v278 = vunpack.c.l.b16 %v191
      %v279 = vunpack.c.l.b16 %v192
      %v280 = vunpack.c.l.b16 %v193
      %v281 = vunpack.c.l.b16 %v194
      %v282 = vunpack.c.l.b16 %v195
      %v283 = vunpack.c.l.b16 %v196
      %v284 = vunpack.c.l.b16 %v197
      %v285 = vunpack.c.l.b16 %v198
      %v286 = vunpack.c.l.b16 %v199
      %v287 = vunpack.c.l.b16 %v200
      %v288 = vunpack.c.l.b16 %v201
      %v289 = vunpack.c.l.b16 %v202
      %v290 = vunpack.c.l.b16 %v203
      %v291 = vunpack.c.l.b16 %v204
      %v292 = vunpack.c.l.b16 %v205
      %v293 = vunpack.c.l.b16 %v206
      %v294 = vpack.c.b16 %v263, %v262
      %v295 = vpack.c.b16 %v265, %v264
      %v296 = vpack.c.b16 %v267, %v266
      %v297 = vpack.c.b16 %v269, %v268
      %v298 = vpack.c.b16 %v271, %v270
      %v299 = vpack.c.b16 %v273, %v272
      %v300 = vpack.c.b16 %v275, %v274
      %v301 = vpack.c.b16 %v277, %v276
      %v302 = vpack.c.b16 %v279, %v278
      %v303 = vpack.c.b16 %v281, %v280
      %v304 = vpack.c.b16 %v283, %v282
      %v305 = vpack.c.b16 %v285, %v284
      %v306 = vpack.c.b16 %v287, %v286
      %v307 = vpack.c.b16 %v289, %v288
      %v308 = vpack.c.b16 %v291, %v290
      %v309 = vpack.c.b16 %v293, %v292
      %v342 = vunpack.c.l.b16 %v207
      %v343 = vunpack.c.l.b16 %v208
      %v344 = vunpack.c.l.b16 %v209
      %v345 = vunpack.c.l.b16 %v210
      %v346 = vunpack.c.l.b16 %v211
      %v347 = vunpack.c.l.b16 %v212
      %v348 = vunpack.c.l.b16 %v213
      %v349 = vunpack.c.l.b16 %v214
      %v350 = vunpack.c.l.b16 %v215
      %v351 = vunpack.c.l.b16 %v216
      %v352 = vunpack.c.l.b16 %v217
      %v353 = vunpack.c.l.b16 %v218
      %v354 = vunpack.c.l.b16 %v219
      %v355 = vunpack.c.l.b16 %v220
      %v356 = vunpack.c.l.b16 %v221
      %v357 = vunpack.c.l.b16 %v222
      %v358 = vpack.c.b16 %v343, %v342
      %v359 = vpack.c.b16 %v345, %v344
      %v360 = vpack.c.b16 %v347, %v346
      %v361 = vpack.c.b16 %v349, %v348
      %v362 = vpack.c.b16 %v351, %v350
      %v363 = vpack.c.b16 %v353, %v352
      %v364 = vpack.c.b16 %v355, %v354
      %v365 = vpack.c.b16 %v357, %v356
      %374 = vmatprep.subr.bf16.mxu0 0
      %375 = vmatpush1.bf16.msra.mxu0 %v358
      %376 = vmatprep.subr.bf16.mxu0 0
      %377 = vmatpush1.bf16.msra.mxu0 %v359
      %378 = vmatprep.subr.bf16.mxu0 0
      %379 = vmatpush1.bf16.msra.mxu0 %v360
      %380 = vmatprep.subr.bf16.mxu0 0
      %381 = vmatpush1.bf16.msra.mxu0 %v361
      %382 = vmatprep.subr.bf16.mxu0 0
      %383 = vmatpush1.bf16.msra.mxu0 %v362
      %384 = vmatprep.subr.bf16.mxu0 0
      %385 = vmatpush1.bf16.msra.mxu0 %v363
      %386 = vmatprep.subr.bf16.mxu0 0
      %387 = vmatpush1.bf16.msra.mxu0 %v364
      %388 = vmatprep.subr.bf16.mxu0 0
      %389 = vmatpush1.bf16.msra.mxu0 %v365
      %390 = vmatprep.subr.bf16.mxu0 0
      %391 = vmatpush1.bf16.msra.mxu0 0
      %392 = vmatprep.subr.bf16.mxu0 0
      %393 = vmatpush1.bf16.msra.mxu0 0
      %394 = vmatprep.subr.bf16.mxu0 0
      %395 = vmatpush1.bf16.msra.mxu0 0
      %396 = vmatprep.subr.bf16.mxu0 0
      %397 = vmatpush1.bf16.msra.mxu0 0
      %398 = vmatprep.subr.bf16.mxu0 0
      %399 = vmatpush1.bf16.msra.mxu0 0
      %400 = vmatprep.subr.bf16.mxu0 0
      %401 = vmatpush1.bf16.msra.mxu0 0
      %402 = vmatprep.subr.bf16.mxu0 0
      %403 = vmatpush1.bf16.msra.mxu0 0
      %404 = vmatprep.subr.bf16.mxu0 0
      %405 = vmatpush1.bf16.msra.mxu0 0
      %406 = vmatprep.mubr.bf16.mxu0 0
      %407 = vmatmul.mubr.bf16.gmra.mrb[0].mxu0 %v294
      %v408 = vpop.f32.mrb[0].mxu0
      %v409 = vadd.f32 %v228, %v408
      %v410 = vpop.f32.mrb[0].mxu0
      %v411 = vpop.f32.mrb[0].mxu0
      %v412 = vadd.f32 %v228, %v411
      %v413 = vpop.f32.mrb[0].mxu0
      %414 = vmatprep.mubr.bf16.mxu0 0
      %415 = vmatmul.mubr.bf16.gmra.mrb[0].mxu0 %v295
      %v416 = vpop.f32.mrb[0].mxu0
      %v417 = vadd.f32 %v228, %v416
      %v418 = vpop.f32.mrb[0].mxu0
      %v419 = vpop.f32.mrb[0].mxu0
      %v420 = vadd.f32 %v228, %v419
      %v421 = vpop.f32.mrb[0].mxu0
      %422 = vmatprep.mubr.bf16.mxu0 0
      %423 = vmatmul.mubr.bf16.gmra.mrb[0].mxu0 %v296
      %v424 = vpop.f32.mrb[0].mxu0
      %v425 = vadd.f32 %v228, %v424
      %v426 = vpop.f32.mrb[0].mxu0
      %v427 = vpop.f32.mrb[0].mxu0
      %v428 = vadd.f32 %v228, %v427
      %v429 = vpop.f32.mrb[0].mxu0
      %430 = vmatprep.mubr.bf16.mxu0 0
      %431 = vmatmul.mubr.bf16.gmra.mrb[0].mxu0 %v297
      %v432 = vpop.f32.mrb[0].mxu0
      %v433 = vadd.f32 %v228, %v432
      %v434 = vpop.f32.mrb[0].mxu0
      %v435 = vpop.f32.mrb[0].mxu0
      %v436 = vadd.f32 %v228, %v435
      %v437 = vpop.f32.mrb[0].mxu0
      %438 = vmatprep.mubr.bf16.mxu0 0
      %439 = vmatmul.mubr.bf16.gmra.mrb[0].mxu0 %v298
      %v440 = vpop.f32.mrb[0].mxu0
      %v441 = vadd.f32 %v228, %v440
      %v442 = vpop.f32.mrb[0].mxu0
      %v443 = vpop.f32.mrb[0].mxu0
      %v444 = vadd.f32 %v228, %v443
      %v445 = vpop.f32.mrb[0].mxu0
      %446 = vmatprep.mubr.bf16.mxu0 0
      %447 = vmatmul.mubr.bf16.gmra.mrb[0].mxu0 %v299
      %v448 = vpop.f32.mrb[0].mxu0
      %v449 = vadd.f32 %v228, %v448
      %v450 = vpop.f32.mrb[0].mxu0
      %v451 = vpop.f32.mrb[0].mxu0
      %v452 = vadd.f32 %v228, %v451
      %v453 = vpop.f32.mrb[0].mxu0
      %454 = vmatprep.mubr.bf16.mxu0 0
      %455 = vmatmul.mubr.bf16.gmra.mrb[0].mxu0 %v300
      %v456 = vpop.f32.mrb[0].mxu0
      %v457 = vadd.f32 %v228, %v456
      %v458 = vpop.f32.mrb[0].mxu0
      %v459 = vpop.f32.mrb[0].mxu0
      %v460 = vadd.f32 %v228, %v459
      %v461 = vpop.f32.mrb[0].mxu0
      %462 = vmatprep.mubr.bf16.mxu0 0
      %463 = vmatmul.mubr.bf16.gmra.mrb[0].mxu0 %v301
      %v464 = vpop.f32.mrb[0].mxu0
      %v465 = vadd.f32 %v228, %v464
      %v466 = vpop.f32.mrb[0].mxu0
      %v467 = vpop.f32.mrb[0].mxu0
      %v468 = vadd.f32 %v228, %v467
      %v469 = vpop.f32.mrb[0].mxu0
      %470 = vmatprep.mubr.bf16.mxu0 0
      %471 = vmatmul.mubr.bf16.gmra.mrb[0].mxu0 %v302
      %v472 = vpop.f32.mrb[0].mxu0
      %v473 = vadd.f32 %v228, %v472
      %v474 = vpop.f32.mrb[0].mxu0
      %v475 = vpop.f32.mrb[0].mxu0
      %v476 = vadd.f32 %v228, %v475
      %v477 = vpop.f32.mrb[0].mxu0
      %478 = vmatprep.mubr.bf16.mxu0 0
      %479 = vmatmul.mubr.bf16.gmra.mrb[0].mxu0 %v303
      %v480 = vpop.f32.mrb[0].mxu0
      %v481 = vadd.f32 %v228, %v480
      %v482 = vpop.f32.mrb[0].mxu0
      %v483 = vpop.f32.mrb[0].mxu0
      %v484 = vadd.f32 %v228, %v483
      %v485 = vpop.f32.mrb[0].mxu0
      %486 = vmatprep.mubr.bf16.mxu0 0
      %487 = vmatmul.mubr.bf16.gmra.mrb[0].mxu0 %v304
      %v488 = vpop.f32.mrb[0].mxu0
      %v489 = vadd.f32 %v228, %v488
      %v490 = vpop.f32.mrb[0].mxu0
      %v491 = vpop.f32.mrb[0].mxu0
      %v492 = vadd.f32 %v228, %v491
      %v493 = vpop.f32.mrb[0].mxu0
      %494 = vmatprep.mubr.bf16.mxu0 0
      %495 = vmatmul.mubr.bf16.gmra.mrb[0].mxu0 %v305
      %v496 = vpop.f32.mrb[0].mxu0
      %v497 = vadd.f32 %v228, %v496
      %v498 = vpop.f32.mrb[0].mxu0
      %v499 = vpop.f32.mrb[0].mxu0
      %v500 = vadd.f32 %v228, %v499
      %v501 = vpop.f32.mrb[0].mxu0
      %502 = vmatprep.mubr.bf16.mxu0 0
      %503 = vmatmul.mubr.bf16.gmra.mrb[0].mxu0 %v306
      %v504 = vpop.f32.mrb[0].mxu0
      %v505 = vadd.f32 %v228, %v504
      %v506 = vpop.f32.mrb[0].mxu0
      %v507 = vpop.f32.mrb[0].mxu0
      %v508 = vadd.f32 %v228, %v507
      %v509 = vpop.f32.mrb[0].mxu0
      %510 = vmatprep.mubr.bf16.mxu0 0
      %511 = vmatmul.mubr.bf16.gmra.mrb[0].mxu0 %v307
      %v512 = vpop.f32.mrb[0].mxu0
      %v513 = vadd.f32 %v228, %v512
      %v514 = vpop.f32.mrb[0].mxu0
      %v515 = vpop.f32.mrb[0].mxu0
      %v516 = vadd.f32 %v228, %v515
      %v517 = vpop.f32.mrb[0].mxu0
      %518 = vmatprep.mubr.bf16.mxu0 0
      %519 = vmatmul.mubr.bf16.gmra.mrb[0].mxu0 %v308
      %v520 = vpop.f32.mrb[0].mxu0
      %v521 = vadd.f32 %v228, %v520
      %v522 = vpop.f32.mrb[0].mxu0
      %v523 = vpop.f32.mrb[0].mxu0
      %v524 = vadd.f32 %v228, %v523
      %v525 = vpop.f32.mrb[0].mxu0
      %526 = vmatprep.mubr.bf16.mxu0 0
      %527 = vmatmul.mubr.bf16.gmra.mrb[0].mxu0 %v309
      %v528 = vpop.f32.mrb[0].mxu0
      %v529 = vadd.f32 %v228, %v528
      %v530 = vpop.f32.mrb[0].mxu0
      %v531 = vpop.f32.mrb[0].mxu0
      %v532 = vadd.f32 %v228, %v531
      %v533 = vpop.f32.mrb[0].mxu0
      %534 = vdwg.mxu0
      %535 = vst [vmem:[%s172] sm:$0xff] %v409
      %536 = vst [vmem:[%s172 + $0x8] sm:$0xff] %v412
      %537 = vst [vmem:[%s172 + $0x10] sm:$0xff] %v417
      %538 = vst [vmem:[%s172 + $0x18] sm:$0xff] %v420
      %539 = vst [vmem:[%s172 + $0x20] sm:$0xff] %v425
      %540 = vst [vmem:[%s172 + $0x28] sm:$0xff] %v428
      %541 = vst [vmem:[%s172 + $0x30] sm:$0xff] %v433
      %542 = vst [vmem:[%s172 + $0x38] sm:$0xff] %v436
      %543 = vst [vmem:[%s172 + $0x40] sm:$0xff] %v441
      %544 = vst [vmem:[%s172 + $0x48] sm:$0xff] %v444
      %545 = vst [vmem:[%s172 + $0x50] sm:$0xff] %v449
      %546 = vst [vmem:[%s172 + $0x58] sm:$0xff] %v452
      %547 = vst [vmem:[%s172 + $0x60] sm:$0xff] %v457
      %548 = vst [vmem:[%s172 + $0x68] sm:$0xff] %v460
      %549 = vst [vmem:[%s172 + $0x70] sm:$0xff] %v465
      %550 = vst [vmem:[%s172 + $0x78] sm:$0xff] %v468
      %551 = vst [vmem:[%s172 + $0x80] sm:$0xff] %v473
      %552 = vst [vmem:[%s172 + $0x88] sm:$0xff] %v476
      %553 = vst [vmem:[%s172 + $0x90] sm:$0xff] %v481
      %554 = vst [vmem:[%s172 + $0x98] sm:$0xff] %v484
      %555 = vst [vmem:[%s172 + $0xa0] sm:$0xff] %v489
      %556 = vst [vmem:[%s172 + $0xa8] sm:$0xff] %v492
      %557 = vst [vmem:[%s172 + $0xb0] sm:$0xff] %v497
      %558 = vst [vmem:[%s172 + $0xb8] sm:$0xff] %v500
      %559 = vst [vmem:[%s172 + $0xc0] sm:$0xff] %v505
      %560 = vst [vmem:[%s172 + $0xc8] sm:$0xff] %v508
      %561 = vst [vmem:[%s172 + $0xd0] sm:$0xff] %v513
      %562 = vst [vmem:[%s172 + $0xd8] sm:$0xff] %v516
      %563 = vst [vmem:[%s172 + $0xe0] sm:$0xff] %v521
      %564 = vst [vmem:[%s172 + $0xe8] sm:$0xff] %v524
      %565 = vst [vmem:[%s172 + $0xf0] sm:$0xff] %v529
      %566 = vst [vmem:[%s172 + $0xf8] sm:$0xff] %v532
      %s567 = smul.u32 32, %s14
      %p568 = scmp.lt.s32.totalorder %s567, 63
      %s569 = scalar_select %p568, %s567, 63
      %s570 = smul.addr %s569, 8
      %s571 = scalar_lea.vmem %s3, %s570
      // Predicated region
      $region33: #{bayes_conv2d_forward.1} parent=31 // pred_check
        %p572 = pneg %p100
      $region34: #{bayes_conv2d_forward.1} parent=31 // pred_check_branch
        %574 = sbr.rel (%p572) target = $region36
      $region35: #{bayes_conv2d_forward.1} parent=31 // pred_region
        %s575 = smul.u32 32, %s14
      $region36: #{bayes_conv2d_forward.1} parent=31 // pred_fallthru
        _
    $region32: #{bayes_conv2d_forward.1} parent=5 // pred_fallthru
      _
    %p576 = scmp.le.s32.totalorder 2, %s9
    // Predicated region
    $region37: #{bayes_conv2d_forward.1} parent=5 // pred_check
      %p577 = pneg %p576
    $region38: #{bayes_conv2d_forward.1} parent=5 // pred_check_branch
      %579 = sbr.rel (%p577) target = $region40
    $region39: #{bayes_conv2d_forward.1} parent=5 // pred_region
      %s580 = ssub.s32 %s9, 2
      // Predicated region
      $region41: #{bayes_conv2d_forward.1} parent=39 // pred_check
        %p581 = pneg %p106
      $region42: #{bayes_conv2d_forward.1} parent=39 // pred_check_branch
        %583 = sbr.rel (%p581) target = $region44
      $region43: #{bayes_conv2d_forward.1} parent=39 // pred_region
        %s584 = smul.u32 32, %s15
        %p585 = scmp.lt.s32.totalorder %s584, 63
        %s586 = scalar_select %p585, %s584, 63
        %s587 = smul.addr %s586, 8
        %s588 = scalar_lea.vmem %s3, %s587
      $region44: #{bayes_conv2d_forward.1} parent=39 // pred_fallthru
        _
    $region40: #{bayes_conv2d_forward.1} parent=5 // pred_fallthru
      _
  $region6: #{bayes_conv2d_forward.1} parent=0 // loop_footer
    %s13 = sadd.s32 1, %s9
  $region7: #{bayes_conv2d_forward.1} parent=0 // loop_footer_branch
    %8 = sbr.rel target = $region3
  $region8: #{bayes_conv2d_forward.1} parent=0 // loop_exit
    _

</llo_original>
